<compile_context>
chip_gen: v7x
topology: tpu7x:2x2x1
jax: 0.10.0
libtpu: 0.0.40
codegen_flags: <defaults>
</compile_context>

<pallas_src>
import functools

import jax
import jax.numpy as jnp
import numpy as np
from jax.experimental import pallas as pl
from jax.experimental.pallas import tpu as pltpu


def _spline_kernel(x_ref, tab_ref, edge_ref, sel_ref, y_ref, ld_ref, *,
                   min_val, max_val, n_edges):
    scale = max_val - min_val
    x = x_ref[...]                               # [TR, 128] flat, lane%D = dim
    xs = (x - min_val) / scale                   # normalized to [0, 1]

    a_tab = tab_ref[0]                           # [G2, 128]  cdf - grid*slope
    s_tab = tab_ref[1]                           # [G2, 128]  slope
    edges = edge_ref[...]                        # [n_edges, 128]  knots

    # Leftmost bin is exactly (a=0, slope=1); walk the ordered knots with
    # select-replace: 1 compare + 2 selects per knot, pure VPU work.
    acc_a = jnp.zeros_like(xs)
    acc_s = jnp.ones_like(xs)
    for j in range(n_edges):
        mask = xs >= edges[j]
        acc_a = jnp.where(mask, a_tab[j + 1], acc_a)
        acc_s = jnp.where(mask, s_tab[j + 1], acc_s)

    y_ref[...] = (acc_a + xs * acc_s) * scale + min_val

    # Per-batch logdet: sum log(slope) over the D adjacent lanes of each batch
    # element via a constant 0/1 selection matmul (idle MXU; log on the EUP).
    ld = jnp.dot(jnp.log(acc_s), sel_ref[...],
                 preferred_element_type=jnp.float32)
    ld_ref[...] = ld.astype(ld_ref.dtype)


def _row_tile(n_rows):
    """Rows (of 128 lanes) per grid step."""
    if n_rows <= 8:
        return 8                           # one tiny tile
    if n_rows >= 1024:
        return 512                         # 256 KiB x-tiles, many grid steps
    # medium sizes: at least two grid steps so v7x can feed both TensorCores
    half = (n_rows + 1) // 2
    return ((half + 7) // 8) * 8


def linear_spline_flow(x, unnormed_pdf, min_val=-1.0, max_val=1.0):
    """Forward pass of LinearSplineFlow (inverse=False)."""
    # TODO(synk): inverse=True branch (cdf/grid swap) not wired up here.
    B, D = x.shape
    if unnormed_pdf.ndim == 2:
        unnormed_pdf = unnormed_pdf[None]
    P = unnormed_pdf.shape[-1]
    dtype = x.dtype
    eps = 1e-7
    G2 = P + 2
    n_edges = P + 1

    # --- parameter-only precompute (plain JAX glue, O(D*P)) -----------------
    pdf = jax.nn.softmax(unnormed_pdf[0].astype(dtype), axis=-1)          # [D, P]
    cdf = jnp.concatenate(
        [jnp.zeros((D, 1), dtype), jnp.cumsum(pdf, axis=-1)], axis=-1)    # [D, P+1]
    grid1 = jnp.linspace(0.0, 1.0, P + 1, dtype=dtype)                    # [P+1]
    grid = jnp.broadcast_to(grid1, (D, P + 1))
    ones = jnp.ones((D, 1), dtype)
    slope_mid = (cdf[:, 1:] - cdf[:, :-1]) / (grid[:, 1:] - grid[:, :-1] + eps)
    slope = jnp.concatenate([ones, slope_mid, ones], axis=-1)             # [D, G2]
    cdf_pad = jnp.concatenate([jnp.zeros((D, 1), dtype), cdf], axis=-1)   # [D, G2]
    grid_pad = jnp.concatenate([grid[:, :1], grid], axis=-1)              # [D, G2]
    a = cdf_pad - grid_pad * slope                                        # [D, G2]

    # --- lane-periodic flat layout: dim index == lane % D_pad ---------------
    if D > 128:
        # TODO(synk): n_dims > 128 needs a per-row (lane+row periodic) layout.
        raise NotImplementedError("linear_spline_flow: n_dims > 128")
    D_pad = 1
    while D_pad < D:
        D_pad *= 2                         # smallest power of two >= D (| 128)
    if D_pad != D:
        # Padded dims use identity bins (a=0, slope=1) -> logdet adds log(1)=0.
        x = jnp.pad(x, ((0, 0), (0, D_pad - D)))
        a = jnp.concatenate([a, jnp.zeros((D_pad - D, G2), dtype)], axis=0)
        slope = jnp.concatenate([slope, jnp.ones((D_pad - D, G2), dtype)],
                                axis=0)

    rep = 128 // D_pad
    tab = jnp.stack([jnp.tile(a.T, (1, rep)),
                     jnp.tile(slope.T, (1, rep))], axis=0)                # [2, G2, 128]
    edges = jnp.broadcast_to(grid1[:, None], (n_edges, 128))              # [P+1, 128]
    G = 128 // D_pad                                                      # groups / row
    sel = (jnp.arange(128)[:, None] // D_pad
           == jnp.arange(G)[None, :]).astype(dtype)                       # [128, G]

    N = B * D_pad
    n_rows = -(-N // 128)
    TR = _row_tile(n_rows)
    n_rows_pad = -(-n_rows // TR) * TR
    N_pad = n_rows_pad * 128

    x_flat = x.reshape(-1)
    if N_pad != N:
        x_flat = jnp.pad(x_flat, (0, N_pad - N))
    x_rows = x_flat.reshape(n_rows_pad, 128)

    kernel = functools.partial(_spline_kernel, min_val=float(min_val),
                               max_val=float(max_val), n_edges=n_edges)

    y_rows, ld_rows = pl.pallas_call(
        kernel,
        out_shape=(jax.ShapeDtypeStruct((n_rows_pad, 128), dtype),
                   jax.ShapeDtypeStruct((n_rows_pad, G), dtype)),
        grid_spec=pltpu.PrefetchScalarGridSpec(
            num_scalar_prefetch=0,
            grid=(n_rows_pad // TR,),
            in_specs=[
                pl.BlockSpec((TR, 128), lambda i: (i, 0)),         # x tile
                pl.BlockSpec((2, G2, 128), lambda i: (0, 0, 0)),   # a / slope
                pl.BlockSpec((n_edges, 128), lambda i: (0, 0)),    # knots
                pl.BlockSpec((128, G), lambda i: (0, 0)),          # logdet sel
            ],
            out_specs=[
                pl.BlockSpec((TR, 128), lambda i: (i, 0)),         # y tile
                pl.BlockSpec((TR, G), lambda i: (i, 0)),           # logdet tile
            ],
        ),
        compiler_params=pltpu.CompilerParams(
            dimension_semantics=("parallel",)),
    )(x_rows, tab, edges, sel)

    y = y_rows.reshape(-1)[:N].reshape(B, D_pad)[:, :D]    # free when no pad
    logdet = ld_rows.reshape(-1)[:B].reshape(B, 1)
    return y, logdet


def _reference(x, unnormed_pdf, min_val, max_val):
    """Pure-JAX port of the PyTorch module, used only for verification."""
    eps = 1e-7
    B, D = x.shape
    P = unnormed_pdf.shape[-1]
    xs = (x - min_val) / (max_val - min_val)
    pdf = jax.nn.softmax(unnormed_pdf, axis=-1)
    cdf = jnp.concatenate(
        [jnp.zeros((1, D, 1), x.dtype), jnp.cumsum(pdf, axis=-1)], axis=-1)
    grid = jnp.broadcast_to(
        jnp.linspace(0.0, 1.0, P + 1, dtype=x.dtype), (1, D, P + 1))
    x3 = xs[:, :, None]
    is_in = (x3 >= grid[..., :-1]) & (x3 < grid[..., 1:])
    is_left = x3 < grid[..., :1]
    is_right = x3 >= grid[..., -1:]
    bf = jnp.concatenate([is_left, is_in, is_right], axis=-1).astype(x.dtype)
    dx = x3 - grid
    dx = jnp.concatenate([dx[..., :1], dx], axis=-1)
    slope = (cdf[..., 1:] - cdf[..., :-1]) / (grid[..., 1:] - grid[..., :-1] + eps)
    one = jnp.ones((1, D, 1), x.dtype)
    slope = jnp.concatenate([one, slope, one], axis=-1)
    cdfp = jnp.concatenate([jnp.zeros((1, D, 1), x.dtype), cdf], axis=-1)
    y = ((cdfp + dx * slope) * bf).sum(-1)
    logdet = jnp.log((slope * bf).sum(-1)).sum(-1, keepdims=True)
    y = y * (max_val - min_val) + min_val
    return y, logdet


def _check(B, n_dims, n_points, min_val, max_val, seed):
    key = jax.random.PRNGKey(seed)
    kx, kp = jax.random.split(key)
    x = jax.random.uniform(kx, (B, n_dims), jnp.float32,
                           minval=min_val - 0.25, maxval=max_val + 0.25)
    # Module parameter shape from __init__: (1, n_dims, n_points).
    unnormed_pdf = 0.5 * jax.random.normal(kp, (1, n_dims, n_points),
                                           jnp.float32)

    y, logdet = linear_spline_flow(x, unnormed_pdf, min_val, max_val)
    jax.block_until_ready((y, logdet))

    y_ref, ld_ref = _reference(x, unnormed_pdf, min_val, max_val)
    assert y.shape == (B, n_dims) and logdet.shape == (B, 1)
    np.testing.assert_allclose(np.asarray(y), np.asarray(y_ref),
                               rtol=1e-5, atol=1e-5)
    np.testing.assert_allclose(np.asarray(logdet), np.asarray(ld_ref),
                               rtol=1e-5, atol=1e-5)


if __name__ == "__main__":
    # Small shape consistent with the module (batch=8, n_dims=4, n_points=8).
    _check(B=8, n_dims=4, n_points=8, min_val=-1.0, max_val=1.0, seed=0)
    # Larger batch exercises full 128-lane rows and the 2-step parallel grid.
    _check(B=1024, n_dims=4, n_points=8, min_val=-1.0, max_val=1.0, seed=0)
    # Ragged case exercises the dim-padding (D -> 8) and flat-padding paths.
    _check(B=37, n_dims=5, n_points=6, min_val=-2.0, max_val=1.5, seed=0)
    print("KERNEL_OK")
</pallas_src>

<mosaic_0001>
module attributes {stable_mosaic.version = 11 : i64} {
  func.func @_spline_kernel(%arg0: i32, %arg1: memref<8x128xf32, #tpu.memory_space<vmem>>, %arg2: memref<2x10x128xf32, #tpu.memory_space<vmem>>, %arg3: memref<9x128xf32, #tpu.memory_space<vmem>>, %arg4: memref<128x32xf32, #tpu.memory_space<vmem>>, %arg5: memref<8x128xf32, #tpu.memory_space<vmem>>, %arg6: memref<8x32xf32, #tpu.memory_space<vmem>>) attributes {dimension_semantics = [#tpu.dimension_semantics<parallel>], iteration_bounds = array<i64: 1>, scalar_prefetch = 0 : i64, scratch_operands = 0 : i64, tpu.core_type = #tpu.core_type<tc>, window_params = [{transform_indices = @transform_0, window_bounds = array<i64: 8, 128>}, {pipeline_mode = #tpu.pipeline_mode<synchronous>, transform_indices = @transform_1, window_bounds = array<i64: 2, 10, 128>}, {pipeline_mode = #tpu.pipeline_mode<synchronous>, transform_indices = @transform_2, window_bounds = array<i64: 9, 128>}, {pipeline_mode = #tpu.pipeline_mode<synchronous>, transform_indices = @transform_3, window_bounds = array<i64: 128, 32>}, {transform_indices = @transform_4, window_bounds = array<i64: 8, 128>}, {transform_indices = @transform_5, window_bounds = array<i64: 8, 32>}]} {
    %c0 = arith.constant 0 : index
    %c0_0 = arith.constant 0 : index
    %0 = vector.load %arg1[%c0, %c0_0] : memref<8x128xf32, #tpu.memory_space<vmem>>, vector<8x128xf32>
    %cst = arith.constant -1.000000e+00 : f32
    %1 = vector.broadcast %cst : f32 to vector<8x128xf32>
    %2 = arith.subf %0, %1 : vector<8x128xf32>
    %cst_1 = arith.constant 2.000000e+00 : f32
    %3 = vector.broadcast %cst_1 : f32 to vector<8x128xf32>
    %4 = arith.divf %2, %3 : vector<8x128xf32>
    %c0_2 = arith.constant 0 : index
    %c0_3 = arith.constant 0 : index
    %c0_4 = arith.constant 0 : index
    %5 = vector.load %arg2[%c0_2, %c0_3, %c0_4] : memref<2x10x128xf32, #tpu.memory_space<vmem>>, vector<1x10x128xf32>
    %6 = vector.shape_cast %5 : vector<1x10x128xf32> to vector<10x128xf32>
    %c1 = arith.constant 1 : index
    %c0_5 = arith.constant 0 : index
    %c0_6 = arith.constant 0 : index
    %7 = vector.load %arg2[%c1, %c0_5, %c0_6] : memref<2x10x128xf32, #tpu.memory_space<vmem>>, vector<1x10x128xf32>
    %8 = vector.shape_cast %7 : vector<1x10x128xf32> to vector<10x128xf32>
    %c0_7 = arith.constant 0 : index
    %c0_8 = arith.constant 0 : index
    %9 = vector.load %arg3[%c0_7, %c0_8] : memref<9x128xf32, #tpu.memory_space<vmem>>, vector<9x128xf32>
    %cst_9 = arith.constant 0.000000e+00 : f32
    %10 = vector.broadcast %cst_9 : f32 to vector<8x128xf32>
    %cst_10 = arith.constant 1.000000e+00 : f32
    %11 = vector.broadcast %cst_10 : f32 to vector<8x128xf32>
    %12 = vector.extract_strided_slice %9 {offsets = [0, 0], sizes = [1, 128], strides = [1, 1]} : vector<9x128xf32> to vector<1x128xf32>
    %13 = vector.shape_cast %12 : vector<1x128xf32> to vector<128xf32>
    %14 = vector.shape_cast %13 : vector<128xf32> to vector<1x128xf32>
    %15 = vector.broadcast %14 : vector<1x128xf32> to vector<8x128xf32>
    %16 = arith.cmpf oge, %4, %15 : vector<8x128xf32>
    %17 = vector.extract_strided_slice %6 {offsets = [1, 0], sizes = [1, 128], strides = [1, 1]} : vector<10x128xf32> to vector<1x128xf32>
    %18 = vector.shape_cast %17 : vector<1x128xf32> to vector<128xf32>
    %19 = vector.shape_cast %18 : vector<128xf32> to vector<1x128xf32>
    %20 = vector.broadcast %19 : vector<1x128xf32> to vector<8x128xf32>
    %21 = arith.select %16, %20, %10 : vector<8x128xi1>, vector<8x128xf32>
    %22 = vector.extract_strided_slice %8 {offsets = [1, 0], sizes = [1, 128], strides = [1, 1]} : vector<10x128xf32> to vector<1x128xf32>
    %23 = vector.shape_cast %22 : vector<1x128xf32> to vector<128xf32>
    %24 = vector.shape_cast %23 : vector<128xf32> to vector<1x128xf32>
    %25 = vector.broadcast %24 : vector<1x128xf32> to vector<8x128xf32>
    %26 = arith.select %16, %25, %11 : vector<8x128xi1>, vector<8x128xf32>
    %27 = vector.extract_strided_slice %9 {offsets = [1, 0], sizes = [1, 128], strides = [1, 1]} : vector<9x128xf32> to vector<1x128xf32>
    %28 = vector.shape_cast %27 : vector<1x128xf32> to vector<128xf32>
    %29 = vector.shape_cast %28 : vector<128xf32> to vector<1x128xf32>
    %30 = vector.broadcast %29 : vector<1x128xf32> to vector<8x128xf32>
    %31 = arith.cmpf oge, %4, %30 : vector<8x128xf32>
    %32 = vector.extract_strided_slice %6 {offsets = [2, 0], sizes = [1, 128], strides = [1, 1]} : vector<10x128xf32> to vector<1x128xf32>
    %33 = vector.shape_cast %32 : vector<1x128xf32> to vector<128xf32>
    %34 = vector.shape_cast %33 : vector<128xf32> to vector<1x128xf32>
    %35 = vector.broadcast %34 : vector<1x128xf32> to vector<8x128xf32>
    %36 = arith.select %31, %35, %21 : vector<8x128xi1>, vector<8x128xf32>
    %37 = vector.extract_strided_slice %8 {offsets = [2, 0], sizes = [1, 128], strides = [1, 1]} : vector<10x128xf32> to vector<1x128xf32>
    %38 = vector.shape_cast %37 : vector<1x128xf32> to vector<128xf32>
    %39 = vector.shape_cast %38 : vector<128xf32> to vector<1x128xf32>
    %40 = vector.broadcast %39 : vector<1x128xf32> to vector<8x128xf32>
    %41 = arith.select %31, %40, %26 : vector<8x128xi1>, vector<8x128xf32>
    %42 = vector.extract_strided_slice %9 {offsets = [2, 0], sizes = [1, 128], strides = [1, 1]} : vector<9x128xf32> to vector<1x128xf32>
    %43 = vector.shape_cast %42 : vector<1x128xf32> to vector<128xf32>
    %44 = vector.shape_cast %43 : vector<128xf32> to vector<1x128xf32>
    %45 = vector.broadcast %44 : vector<1x128xf32> to vector<8x128xf32>
    %46 = arith.cmpf oge, %4, %45 : vector<8x128xf32>
    %47 = vector.extract_strided_slice %6 {offsets = [3, 0], sizes = [1, 128], strides = [1, 1]} : vector<10x128xf32> to vector<1x128xf32>
    %48 = vector.shape_cast %47 : vector<1x128xf32> to vector<128xf32>
    %49 = vector.shape_cast %48 : vector<128xf32> to vector<1x128xf32>
    %50 = vector.broadcast %49 : vector<1x128xf32> to vector<8x128xf32>
    %51 = arith.select %46, %50, %36 : vector<8x128xi1>, vector<8x128xf32>
    %52 = vector.extract_strided_slice %8 {offsets = [3, 0], sizes = [1, 128], strides = [1, 1]} : vector<10x128xf32> to vector<1x128xf32>
    %53 = vector.shape_cast %52 : vector<1x128xf32> to vector<128xf32>
    %54 = vector.shape_cast %53 : vector<128xf32> to vector<1x128xf32>
    %55 = vector.broadcast %54 : vector<1x128xf32> to vector<8x128xf32>
    %56 = arith.select %46, %55, %41 : vector<8x128xi1>, vector<8x128xf32>
    %57 = vector.extract_strided_slice %9 {offsets = [3, 0], sizes = [1, 128], strides = [1, 1]} : vector<9x128xf32> to vector<1x128xf32>
    %58 = vector.shape_cast %57 : vector<1x128xf32> to vector<128xf32>
    %59 = vector.shape_cast %58 : vector<128xf32> to vector<1x128xf32>
    %60 = vector.broadcast %59 : vector<1x128xf32> to vector<8x128xf32>
    %61 = arith.cmpf oge, %4, %60 : vector<8x128xf32>
    %62 = vector.extract_strided_slice %6 {offsets = [4, 0], sizes = [1, 128], strides = [1, 1]} : vector<10x128xf32> to vector<1x128xf32>
    %63 = vector.shape_cast %62 : vector<1x128xf32> to vector<128xf32>
    %64 = vector.shape_cast %63 : vector<128xf32> to vector<1x128xf32>
    %65 = vector.broadcast %64 : vector<1x128xf32> to vector<8x128xf32>
    %66 = arith.select %61, %65, %51 : vector<8x128xi1>, vector<8x128xf32>
    %67 = vector.extract_strided_slice %8 {offsets = [4, 0], sizes = [1, 128], strides = [1, 1]} : vector<10x128xf32> to vector<1x128xf32>
    %68 = vector.shape_cast %67 : vector<1x128xf32> to vector<128xf32>
    %69 = vector.shape_cast %68 : vector<128xf32> to vector<1x128xf32>
    %70 = vector.broadcast %69 : vector<1x128xf32> to vector<8x128xf32>
    %71 = arith.select %61, %70, %56 : vector<8x128xi1>, vector<8x128xf32>
    %72 = vector.extract_strided_slice %9 {offsets = [4, 0], sizes = [1, 128], strides = [1, 1]} : vector<9x128xf32> to vector<1x128xf32>
    %73 = vector.shape_cast %72 : vector<1x128xf32> to vector<128xf32>
    %74 = vector.shape_cast %73 : vector<128xf32> to vector<1x128xf32>
    %75 = vector.broadcast %74 : vector<1x128xf32> to vector<8x128xf32>
    %76 = arith.cmpf oge, %4, %75 : vector<8x128xf32>
    %77 = vector.extract_strided_slice %6 {offsets = [5, 0], sizes = [1, 128], strides = [1, 1]} : vector<10x128xf32> to vector<1x128xf32>
    %78 = vector.shape_cast %77 : vector<1x128xf32> to vector<128xf32>
    %79 = vector.shape_cast %78 : vector<128xf32> to vector<1x128xf32>
    %80 = vector.broadcast %79 : vector<1x128xf32> to vector<8x128xf32>
    %81 = arith.select %76, %80, %66 : vector<8x128xi1>, vector<8x128xf32>
    %82 = vector.extract_strided_slice %8 {offsets = [5, 0], sizes = [1, 128], strides = [1, 1]} : vector<10x128xf32> to vector<1x128xf32>
    %83 = vector.shape_cast %82 : vector<1x128xf32> to vector<128xf32>
    %84 = vector.shape_cast %83 : vector<128xf32> to vector<1x128xf32>
    %85 = vector.broadcast %84 : vector<1x128xf32> to vector<8x128xf32>
    %86 = arith.select %76, %85, %71 : vector<8x128xi1>, vector<8x128xf32>
    %87 = vector.extract_strided_slice %9 {offsets = [5, 0], sizes = [1, 128], strides = [1, 1]} : vector<9x128xf32> to vector<1x128xf32>
    %88 = vector.shape_cast %87 : vector<1x128xf32> to vector<128xf32>
    %89 = vector.shape_cast %88 : vector<128xf32> to vector<1x128xf32>
    %90 = vector.broadcast %89 : vector<1x128xf32> to vector<8x128xf32>
    %91 = arith.cmpf oge, %4, %90 : vector<8x128xf32>
    %92 = vector.extract_strided_slice %6 {offsets = [6, 0], sizes = [1, 128], strides = [1, 1]} : vector<10x128xf32> to vector<1x128xf32>
    %93 = vector.shape_cast %92 : vector<1x128xf32> to vector<128xf32>
    %94 = vector.shape_cast %93 : vector<128xf32> to vector<1x128xf32>
    %95 = vector.broadcast %94 : vector<1x128xf32> to vector<8x128xf32>
    %96 = arith.select %91, %95, %81 : vector<8x128xi1>, vector<8x128xf32>
    %97 = vector.extract_strided_slice %8 {offsets = [6, 0], sizes = [1, 128], strides = [1, 1]} : vector<10x128xf32> to vector<1x128xf32>
    %98 = vector.shape_cast %97 : vector<1x128xf32> to vector<128xf32>
    %99 = vector.shape_cast %98 : vector<128xf32> to vector<1x128xf32>
    %100 = vector.broadcast %99 : vector<1x128xf32> to vector<8x128xf32>
    %101 = arith.select %91, %100, %86 : vector<8x128xi1>, vector<8x128xf32>
    %102 = vector.extract_strided_slice %9 {offsets = [6, 0], sizes = [1, 128], strides = [1, 1]} : vector<9x128xf32> to vector<1x128xf32>
    %103 = vector.shape_cast %102 : vector<1x128xf32> to vector<128xf32>
    %104 = vector.shape_cast %103 : vector<128xf32> to vector<1x128xf32>
    %105 = vector.broadcast %104 : vector<1x128xf32> to vector<8x128xf32>
    %106 = arith.cmpf oge, %4, %105 : vector<8x128xf32>
    %107 = vector.extract_strided_slice %6 {offsets = [7, 0], sizes = [1, 128], strides = [1, 1]} : vector<10x128xf32> to vector<1x128xf32>
    %108 = vector.shape_cast %107 : vector<1x128xf32> to vector<128xf32>
    %109 = vector.shape_cast %108 : vector<128xf32> to vector<1x128xf32>
    %110 = vector.broadcast %109 : vector<1x128xf32> to vector<8x128xf32>
    %111 = arith.select %106, %110, %96 : vector<8x128xi1>, vector<8x128xf32>
    %112 = vector.extract_strided_slice %8 {offsets = [7, 0], sizes = [1, 128], strides = [1, 1]} : vector<10x128xf32> to vector<1x128xf32>
    %113 = vector.shape_cast %112 : vector<1x128xf32> to vector<128xf32>
    %114 = vector.shape_cast %113 : vector<128xf32> to vector<1x128xf32>
    %115 = vector.broadcast %114 : vector<1x128xf32> to vector<8x128xf32>
    %116 = arith.select %106, %115, %101 : vector<8x128xi1>, vector<8x128xf32>
    %117 = vector.extract_strided_slice %9 {offsets = [7, 0], sizes = [1, 128], strides = [1, 1]} : vector<9x128xf32> to vector<1x128xf32>
    %118 = vector.shape_cast %117 : vector<1x128xf32> to vector<128xf32>
    %119 = vector.shape_cast %118 : vector<128xf32> to vector<1x128xf32>
    %120 = vector.broadcast %119 : vector<1x128xf32> to vector<8x128xf32>
    %121 = arith.cmpf oge, %4, %120 : vector<8x128xf32>
    %122 = vector.extract_strided_slice %6 {offsets = [8, 0], sizes = [1, 128], strides = [1, 1]} : vector<10x128xf32> to vector<1x128xf32>
    %123 = vector.shape_cast %122 : vector<1x128xf32> to vector<128xf32>
    %124 = vector.shape_cast %123 : vector<128xf32> to vector<1x128xf32>
    %125 = vector.broadcast %124 : vector<1x128xf32> to vector<8x128xf32>
    %126 = arith.select %121, %125, %111 : vector<8x128xi1>, vector<8x128xf32>
    %127 = vector.extract_strided_slice %8 {offsets = [8, 0], sizes = [1, 128], strides = [1, 1]} : vector<10x128xf32> to vector<1x128xf32>
    %128 = vector.shape_cast %127 : vector<1x128xf32> to vector<128xf32>
    %129 = vector.shape_cast %128 : vector<128xf32> to vector<1x128xf32>
    %130 = vector.broadcast %129 : vector<1x128xf32> to vector<8x128xf32>
    %131 = arith.select %121, %130, %116 : vector<8x128xi1>, vector<8x128xf32>
    %132 = vector.extract_strided_slice %9 {offsets = [8, 0], sizes = [1, 128], strides = [1, 1]} : vector<9x128xf32> to vector<1x128xf32>
    %133 = vector.shape_cast %132 : vector<1x128xf32> to vector<128xf32>
    %134 = vector.shape_cast %133 : vector<128xf32> to vector<1x128xf32>
    %135 = vector.broadcast %134 : vector<1x128xf32> to vector<8x128xf32>
    %136 = arith.cmpf oge, %4, %135 : vector<8x128xf32>
    %137 = vector.extract_strided_slice %6 {offsets = [9, 0], sizes = [1, 128], strides = [1, 1]} : vector<10x128xf32> to vector<1x128xf32>
    %138 = vector.shape_cast %137 : vector<1x128xf32> to vector<128xf32>
    %139 = vector.shape_cast %138 : vector<128xf32> to vector<1x128xf32>
    %140 = vector.broadcast %139 : vector<1x128xf32> to vector<8x128xf32>
    %141 = arith.select %136, %140, %126 : vector<8x128xi1>, vector<8x128xf32>
    %142 = vector.extract_strided_slice %8 {offsets = [9, 0], sizes = [1, 128], strides = [1, 1]} : vector<10x128xf32> to vector<1x128xf32>
    %143 = vector.shape_cast %142 : vector<1x128xf32> to vector<128xf32>
    %144 = vector.shape_cast %143 : vector<128xf32> to vector<1x128xf32>
    %145 = vector.broadcast %144 : vector<1x128xf32> to vector<8x128xf32>
    %146 = arith.select %136, %145, %131 : vector<8x128xi1>, vector<8x128xf32>
    %147 = arith.mulf %4, %146 : vector<8x128xf32>
    %148 = arith.addf %141, %147 : vector<8x128xf32>
    %cst_11 = arith.constant 2.000000e+00 : f32
    %149 = vector.broadcast %cst_11 : f32 to vector<8x128xf32>
    %150 = arith.mulf %148, %149 : vector<8x128xf32>
    %cst_12 = arith.constant -1.000000e+00 : f32
    %151 = vector.broadcast %cst_12 : f32 to vector<8x128xf32>
    %152 = arith.addf %150, %151 : vector<8x128xf32>
    %c0_13 = arith.constant 0 : index
    %c0_14 = arith.constant 0 : index
    %153 = vector.load %arg5[%c0_13, %c0_14] : memref<8x128xf32, #tpu.memory_space<vmem>>, vector<8x128xf32>
    tpu.vector_store %arg5[%c0_13, %c0_14], %152 {strides = array<i32>} : memref<8x128xf32, #tpu.memory_space<vmem>>, vector<8x128xf32>,
    %154 = math.log %146 : vector<8x128xf32>
    %c0_15 = arith.constant 0 : index
    %c0_16 = arith.constant 0 : index
    %155 = vector.load %arg4[%c0_15, %c0_16] : memref<128x32xf32, #tpu.memory_space<vmem>>, vector<128x32xf32>
    %cst_17 = arith.constant dense<0.000000e+00> : vector<8x32xf32>
    %156 = tpu.matmul %154, %155, %cst_17 {dimension_numbers = #tpu.dot_dimension_numbers<[1], [0], [0], [1], [0, 0, 1, 1], [], []>} : vector<8x128xf32>, vector<128x32xf32>, vector<8x32xf32> -> vector<8x32xf32>
    %c0_18 = arith.constant 0 : index
    %c0_19 = arith.constant 0 : index
    %157 = vector.load %arg6[%c0_18, %c0_19] : memref<8x32xf32, #tpu.memory_space<vmem>>, vector<8x32xf32>
    tpu.vector_store %arg6[%c0_18, %c0_19], %156 {strides = array<i32>} : memref<8x32xf32, #tpu.memory_space<vmem>>, vector<8x32xf32>,
    return
  }
  func.func @transform_0(%arg0: i32) -> (i32, i32) {
    %c0_i32 = arith.constant 0 : i32
    %c0_i32_0 = arith.constant 0 : i32
    return %arg0, %c0_i32 : i32, i32
  }
  func.func @transform_1(%arg0: i32) -> (i32, i32, i32) {
    %c0_i32 = arith.constant 0 : i32
    %c0_i32_0 = arith.constant 0 : i32
    %c0_i32_1 = arith.constant 0 : i32
    %c0_i32_2 = arith.constant 0 : i32
    return %c0_i32, %c0_i32_0, %c0_i32_1 : i32, i32, i32
  }
  func.func @transform_2(%arg0: i32) -> (i32, i32) {
    %c0_i32 = arith.constant 0 : i32
    %c0_i32_0 = arith.constant 0 : i32
    %c0_i32_1 = arith.constant 0 : i32
    return %c0_i32, %c0_i32_0 : i32, i32
  }
  func.func @transform_3(%arg0: i32) -> (i32, i32) {
    %c0_i32 = arith.constant 0 : i32
    %c0_i32_0 = arith.constant 0 : i32
    %c0_i32_1 = arith.constant 0 : i32
    return %c0_i32, %c0_i32_0 : i32, i32
  }
  func.func @transform_4(%arg0: i32) -> (i32, i32) {
    %c0_i32 = arith.constant 0 : i32
    %c0_i32_0 = arith.constant 0 : i32
    return %arg0, %c0_i32 : i32, i32
  }
  func.func @transform_5(%arg0: i32) -> (i32, i32) {
    %c0_i32 = arith.constant 0 : i32
    %c0_i32_0 = arith.constant 0 : i32
    return %arg0, %c0_i32 : i32, i32
  }
}

</mosaic_0001>

<llo_original>
// kernel: tpu_custom_call.1
$region0: #{tpu_custom_call.1}
  #allocation0 [shape = 'u32[]', space=smem, size = 0x4, offset = 0x4, fixed_abs, tag = 'smem constant byte address 0x4 - core index']
  #allocation1 [shape = 'u32[144,128]{1,0:T(1,128)}', space=vmem, size = 0x12000, scoped, tag = 'internal scratch']
  %s0 = inlined_call_operand.vmem [shape: f32[8,128], index: 0, kind: input, shape index: {}]
  %s1 = inlined_call_operand.vmem [shape: f32[2,10,128], index: 1, kind: input, shape index: {}]
  %s2 = inlined_call_operand.vmem [shape: f32[9,128], index: 2, kind: input, shape index: {}]
  %s3 = inlined_call_operand.vmem [shape: f32[128,32], index: 3, kind: input, shape index: {}]
  %s4 = inlined_call_operand.hbm [shape: f32[8,128], index: 4, kind: output, shape index: {0}]
  %s5 = inlined_call_operand.hbm [shape: f32[8,32], index: 5, kind: output, shape index: {1}]
  %6 = xla_tuple %s4, %s5
  %s7 = sld [smem:[#allocation0]]
  $region34: #{tpu_custom_call.1} parent=0
    _
  %s9 = ssub.s32 1, %s7
  %s10 = scalar_select 0, %s9, %s7
  $region1: #{tpu_custom_call.1} parent=0
    #allocation2 [shape = 'u8[4096]{0}', space=vmem, size = 0x1000, scoped, tag = 'output window, operand 0, single buffered']
    #allocation3 [shape = 's32[1]{0}', space=sflag, size = 0x4, scoped, tag = 'scoped memory for tpu_custom_call.1']
    #allocation4 [shape = 'u8[4096]{0}', space=vmem, size = 0x1000, scoped, tag = 'output window, operand 1, single buffered']
    #allocation5 [shape = 's32[1]{0}', space=sflag, size = 0x4, scoped, tag = 'scoped memory for tpu_custom_call.1']
    %11 = vsyncpa [#allocation3], 0
    %12 = vsyncpa [#allocation5], 0
    // Predicated region
    $region2: #{tpu_custom_call.1} parent=1 // pred_check
      _
    $region3: #{tpu_custom_call.1} parent=1 // pred_check_branch
      %14 = sbr.rel (0) target = $region5
    $region4: #{tpu_custom_call.1} parent=1 // pred_region
      _
    $region5: #{tpu_custom_call.1} parent=1 // pred_fallthru
      _
    // Predicated region
    $region6: #{tpu_custom_call.1} parent=1 // pred_check
      _
    $region7: #{tpu_custom_call.1} parent=1 // pred_check_branch
      %16 = sbr.rel (0) target = $region9
    $region8: #{tpu_custom_call.1} parent=1 // pred_region
      _
    $region9: #{tpu_custom_call.1} parent=1 // pred_fallthru
      _
    // Predicated region
    $region10: #{tpu_custom_call.1} parent=1 // pred_check
      _
    $region11: #{tpu_custom_call.1} parent=1 // pred_check_branch
      %18 = sbr.rel (0) target = $region13
    $region12: #{tpu_custom_call.1} parent=1 // pred_region
      _
    $region13: #{tpu_custom_call.1} parent=1 // pred_fallthru
      _
    // Predicated region
    $region14: #{tpu_custom_call.1} parent=1 // pred_check
      _
    $region15: #{tpu_custom_call.1} parent=1 // pred_check_branch
      %20 = sbr.rel (0) target = $region17
    $region16: #{tpu_custom_call.1} parent=1 // pred_region
      _
    $region17: #{tpu_custom_call.1} parent=1 // pred_fallthru
      _
    %v21 = vld [vmem:[%s0] sm:$0xff]
    %v22 = vsub.f32 %v21, -1.0
    %v23 = vrcp.pop 2.0
    %v24 = vmul.f32 %v22, %v23
    %v25 = vld [vmem:[%s1] sm:$0xff]
    %v26 = vld [vmem:[%s1 + $0x8] sm:$0x3]
    %s27 = scalar_lea.vmem %s1, 16
    %v28 = vld [vmem:[%s27] sm:$0xff]
    %v29 = vld [vmem:[%s27 + $0x8] sm:$0x3]
    %v30 = vld [vmem:[%s2] sm:$0xff]
    %v31 = vld [vmem:[%s2 + $0x8] sm:$0x1]
    %v32 = vlaneseq
    %v33 = vshrl.u32 %v32, 7
    %v34 = vsub.s32 0, %v33
    %v35 = vrot.slane %v30, %v34
    %vm36 = vcmp.ge.f32.partialorder %v24, %v35
    %v37 = vlaneseq
    %v38 = vshrl.u32 %v37, 7
    %v39 = vsub.s32 1, %v38
    %v40 = vrot.slane %v25, %v39
    %v41 = vsel %vm36, %v40, 0.0
    %v42 = vlaneseq
    %v43 = vshrl.u32 %v42, 7
    %v44 = vsub.s32 1, %v43
    %v45 = vrot.slane %v28, %v44
    %v46 = vsel %vm36, %v45, 1.0
    %v47 = vlaneseq
    %v48 = vshrl.u32 %v47, 7
    %v49 = vsub.s32 1, %v48
    %v50 = vrot.slane %v30, %v49
    %vm51 = vcmp.ge.f32.partialorder %v24, %v50
    %v52 = vlaneseq
    %v53 = vshrl.u32 %v52, 7
    %v54 = vsub.s32 2, %v53
    %v55 = vrot.slane %v25, %v54
    %v56 = vsel %vm51, %v55, %v41
    %v57 = vlaneseq
    %v58 = vshrl.u32 %v57, 7
    %v59 = vsub.s32 2, %v58
    %v60 = vrot.slane %v28, %v59
    %v61 = vsel %vm51, %v60, %v46
    %v62 = vlaneseq
    %v63 = vshrl.u32 %v62, 7
    %v64 = vsub.s32 2, %v63
    %v65 = vrot.slane %v30, %v64
    %vm66 = vcmp.ge.f32.partialorder %v24, %v65
    %v67 = vlaneseq
    %v68 = vshrl.u32 %v67, 7
    %v69 = vsub.s32 3, %v68
    %v70 = vrot.slane %v25, %v69
    %v71 = vsel %vm66, %v70, %v56
    %v72 = vlaneseq
    %v73 = vshrl.u32 %v72, 7
    %v74 = vsub.s32 3, %v73
    %v75 = vrot.slane %v28, %v74
    %v76 = vsel %vm66, %v75, %v61
    %v77 = vlaneseq
    %v78 = vshrl.u32 %v77, 7
    %v79 = vsub.s32 3, %v78
    %v80 = vrot.slane %v30, %v79
    %vm81 = vcmp.ge.f32.partialorder %v24, %v80
    %v82 = vlaneseq
    %v83 = vshrl.u32 %v82, 7
    %v84 = vsub.s32 4, %v83
    %v85 = vrot.slane %v25, %v84
    %v86 = vsel %vm81, %v85, %v71
    %v87 = vlaneseq
    %v88 = vshrl.u32 %v87, 7
    %v89 = vsub.s32 4, %v88
    %v90 = vrot.slane %v28, %v89
    %v91 = vsel %vm81, %v90, %v76
    %v92 = vlaneseq
    %v93 = vshrl.u32 %v92, 7
    %v94 = vsub.s32 4, %v93
    %v95 = vrot.slane %v30, %v94
    %vm96 = vcmp.ge.f32.partialorder %v24, %v95
    %v97 = vlaneseq
    %v98 = vshrl.u32 %v97, 7
    %v99 = vsub.s32 5, %v98
    %v100 = vrot.slane %v25, %v99
    %v101 = vsel %vm96, %v100, %v86
    %v102 = vlaneseq
    %v103 = vshrl.u32 %v102, 7
    %v104 = vsub.s32 5, %v103
    %v105 = vrot.slane %v28, %v104
    %v106 = vsel %vm96, %v105, %v91
    %v107 = vlaneseq
    %v108 = vshrl.u32 %v107, 7
    %v109 = vsub.s32 5, %v108
    %v110 = vrot.slane %v30, %v109
    %vm111 = vcmp.ge.f32.partialorder %v24, %v110
    %v112 = vlaneseq
    %v113 = vshrl.u32 %v112, 7
    %v114 = vsub.s32 6, %v113
    %v115 = vrot.slane %v25, %v114
    %v116 = vsel %vm111, %v115, %v101
    %v117 = vlaneseq
    %v118 = vshrl.u32 %v117, 7
    %v119 = vsub.s32 6, %v118
    %v120 = vrot.slane %v28, %v119
    %v121 = vsel %vm111, %v120, %v106
    %v122 = vlaneseq
    %v123 = vshrl.u32 %v122, 7
    %v124 = vsub.s32 6, %v123
    %v125 = vrot.slane %v30, %v124
    %vm126 = vcmp.ge.f32.partialorder %v24, %v125
    %v127 = vlaneseq
    %v128 = vshrl.u32 %v127, 7
    %v129 = vsub.s32 7, %v128
    %v130 = vrot.slane %v25, %v129
    %v131 = vsel %vm126, %v130, %v116
    %v132 = vlaneseq
    %v133 = vshrl.u32 %v132, 7
    %v134 = vsub.s32 7, %v133
    %v135 = vrot.slane %v28, %v134
    %v136 = vsel %vm126, %v135, %v121
    %v137 = vlaneseq
    %v138 = vshrl.u32 %v137, 7
    %v139 = vsub.s32 7, %v138
    %v140 = vrot.slane %v30, %v139
    %vm141 = vcmp.ge.f32.partialorder %v24, %v140
    %v142 = vlaneseq
    %v143 = vshrl.u32 %v142, 7
    %v144 = vsub.s32 0, %v143
    %v145 = vrot.slane %v26, %v144
    %v146 = vsel %vm141, %v145, %v131
    %v147 = vlaneseq
    %v148 = vshrl.u32 %v147, 7
    %v149 = vsub.s32 0, %v148
    %v150 = vrot.slane %v29, %v149
    %v151 = vsel %vm141, %v150, %v136
    %v152 = vlaneseq
    %v153 = vshrl.u32 %v152, 7
    %v154 = vsub.s32 0, %v153
    %v155 = vrot.slane %v31, %v154
    %vm156 = vcmp.ge.f32.partialorder %v24, %v155
    %v157 = vlaneseq
    %v158 = vshrl.u32 %v157, 7
    %v159 = vsub.s32 1, %v158
    %v160 = vrot.slane %v26, %v159
    %v161 = vsel %vm156, %v160, %v146
    %v162 = vlaneseq
    %v163 = vshrl.u32 %v162, 7
    %v164 = vsub.s32 1, %v163
    %v165 = vrot.slane %v29, %v164
    %v166 = vsel %vm156, %v165, %v151
    %v167 = vmul.f32 %v24, %v166
    %v168 = vadd.f32 %v161, %v167
    %v169 = vmul.f32 %v168, 2.0
    %v170 = vadd.f32 %v169, -1.0
    %171 = vst [vmem:[#allocation2] sm:$0xff] %v170
    %v172 = vlog2.pop %v166
    %v173 = vmul.f32 %v172, 0.6931472
    %v174 = vld [vmem:[%s3] sm:$0xff]
    %v175 = vld [vmem:[%s3 + $0x8] sm:$0xff]
    %v176 = vld [vmem:[%s3 + $0x10] sm:$0xff]
    %v177 = vld [vmem:[%s3 + $0x18] sm:$0xff]
    %v178 = vld [vmem:[%s3 + $0x20] sm:$0xff]
    %v179 = vld [vmem:[%s3 + $0x28] sm:$0xff]
    %v180 = vld [vmem:[%s3 + $0x30] sm:$0xff]
    %v181 = vld [vmem:[%s3 + $0x38] sm:$0xff]
    %v182 = vld [vmem:[%s3 + $0x40] sm:$0xff]
    %v183 = vld [vmem:[%s3 + $0x48] sm:$0xff]
    %v184 = vld [vmem:[%s3 + $0x50] sm:$0xff]
    %v185 = vld [vmem:[%s3 + $0x58] sm:$0xff]
    %v186 = vld [vmem:[%s3 + $0x60] sm:$0xff]
    %v187 = vld [vmem:[%s3 + $0x68] sm:$0xff]
    %v188 = vld [vmem:[%s3 + $0x70] sm:$0xff]
    %v189 = vld [vmem:[%s3 + $0x78] sm:$0xff]
    %190 = vmatprep.subr.mxu0 0.0
    %191 = vmatpush1.msra.mxu0 %v174
    %192 = vmatprep.subr.mxu0 0.0
    %193 = vmatpush1.msra.mxu0 %v175
    %194 = vmatprep.subr.mxu0 0.0
    %195 = vmatpush1.msra.mxu0 %v176
    %196 = vmatprep.subr.mxu0 0.0
    %197 = vmatpush1.msra.mxu0 %v177
    %198 = vmatprep.subr.mxu0 0.0
    %199 = vmatpush1.msra.mxu0 %v178
    %200 = vmatprep.subr.mxu0 0.0
    %201 = vmatpush1.msra.mxu0 %v179
    %202 = vmatprep.subr.mxu0 0.0
    %203 = vmatpush1.msra.mxu0 %v180
    %204 = vmatprep.subr.mxu0 0.0
    %205 = vmatpush1.msra.mxu0 %v181
    %206 = vmatprep.subr.mxu0 0.0
    %207 = vmatpush1.msra.mxu0 %v182
    %208 = vmatprep.subr.mxu0 0.0
    %209 = vmatpush1.msra.mxu0 %v183
    %210 = vmatprep.subr.mxu0 0.0
    %211 = vmatpush1.msra.mxu0 %v184
    %212 = vmatprep.subr.mxu0 0.0
    %213 = vmatpush1.msra.mxu0 %v185
    %214 = vmatprep.subr.mxu0 0.0
    %215 = vmatpush1.msra.mxu0 %v186
    %216 = vmatprep.subr.mxu0 0.0
    %217 = vmatpush1.msra.mxu0 %v187
    %218 = vmatprep.subr.mxu0 0.0
    %219 = vmatpush1.msra.mxu0 %v188
    %220 = vmatprep.subr.mxu0 0.0
    %221 = vmatpush1.msra.mxu0 %v189
    %222 = vmatprep.subr.mxu0 0.0
    %223 = vmatpush1.msra.mxu0 0.0
    %224 = vmatprep.subr.mxu0 0.0
    %225 = vmatpush1.msra.mxu0 0.0
    %226 = vmatprep.subr.mxu0 0.0
    %227 = vmatpush1.msra.mxu0 0.0
    %228 = vmatprep.subr.mxu0 0.0
    %229 = vmatpush1.msra.mxu0 0.0
    %230 = vmatprep.subr.mxu0 0.0
    %231 = vmatpush1.msra.mxu0 0.0
    %232 = vmatprep.subr.mxu0 0.0
    %233 = vmatpush1.msra.mxu0 0.0
    %234 = vmatprep.subr.mxu0 0.0
    %235 = vmatpush1.msra.mxu0 0.0
    %236 = vmatprep.subr.mxu0 0.0
    %237 = vmatpush1.msra.mxu0 0.0
    %238 = vmatprep.subr.mxu0 0.0
    %239 = vmatpush1.msra.mxu0 0.0
    %240 = vmatprep.subr.mxu0 0.0
    %241 = vmatpush1.msra.mxu0 0.0
    %242 = vmatprep.subr.mxu0 0.0
    %243 = vmatpush1.msra.mxu0 0.0
    %244 = vmatprep.subr.mxu0 0.0
    %245 = vmatpush1.msra.mxu0 0.0
    %246 = vmatprep.subr.mxu0 0.0
    %247 = vmatpush1.msra.mxu0 0.0
    %248 = vmatprep.subr.mxu0 0.0
    %249 = vmatpush1.msra.mxu0 0.0
    %250 = vmatprep.subr.mxu0 0.0
    %251 = vmatpush1.msra.mxu0 0.0
    %252 = vmatprep.subr.mxu0 0.0
    %253 = vmatpush1.msra.mxu0 0.0
    %254 = vmatprep.mubr.f32.mxu0 0.0
    %255 = vmatmul.mubr.f32.gmra.mrb[0].mxu0 %v173
    %v256 = vpop.f32.mrb[0].mxu0
    %v257 = vadd.f32 0.0, %v256
    %v258 = vpop.f32.mrb[0].mxu0
    %259 = vdwg.mxu0
    %vm260 = vcmask 261120
    %261 = vst.msk [vmem:[#allocation4] sm:$0xff] %vm260, %v257
    // Predicated region
    $region18: #{tpu_custom_call.1} parent=1 // pred_check
      _
    $region19: #{tpu_custom_call.1} parent=1 // pred_check_branch
      %263 = sbr.rel (0) target = $region21
    $region20: #{tpu_custom_call.1} parent=1 // pred_region
      %s265 = ssub.s32 128, 128
      %266 = vsyncadd [#allocation3], %s265
      %s268 = sshll.u32 [#allocation2], 4
      %s269 = int_to_ptr.vmem [resolvable:$true] %s268
      %271 = dma.vmem_to_hbm [thread:$0]  %s269, 128, %s4, [#allocation3]
    $region21: #{tpu_custom_call.1} parent=1 // pred_fallthru
      _
    // Predicated region
    $region22: #{tpu_custom_call.1} parent=1 // pred_check
      _
    $region23: #{tpu_custom_call.1} parent=1 // pred_check_branch
      %273 = sbr.rel (0) target = $region25
    $region24: #{tpu_custom_call.1} parent=1 // pred_region
      %s275 = ssub.s32 128, 128
      %276 = vsyncadd [#allocation5], %s275
      %s278 = sshll.u32 [#allocation4], 4
      %s279 = int_to_ptr.vmem [resolvable:$true] %s278
      %281 = dma.vmem_to_hbm [thread:$0]  %s279, 128, %s5, [#allocation5]
    $region25: #{tpu_custom_call.1} parent=1 // pred_fallthru
      _
    // Predicated region
    $region26: #{tpu_custom_call.1} parent=1 // pred_check
      _
    $region27: #{tpu_custom_call.1} parent=1 // pred_check_branch
      %283 = sbr.rel (0) target = $region29
    $region28: #{tpu_custom_call.1} parent=1 // pred_region
      %284 = dma.done [#allocation3], 128
    $region29: #{tpu_custom_call.1} parent=1 // pred_fallthru
      _
    // Predicated region
    $region30: #{tpu_custom_call.1} parent=1 // pred_check
      _
    $region31: #{tpu_custom_call.1} parent=1 // pred_check_branch
      %286 = sbr.rel (0) target = $region33
    $region32: #{tpu_custom_call.1} parent=1 // pred_region
      %287 = dma.done [#allocation5], 128
    $region33: #{tpu_custom_call.1} parent=1 // pred_fallthru
      _
    %288 = vsyncpa [#allocation3], 1
    %289 = vsyncpa [#allocation5], 1

</llo_original>
